<compile_context>
chip_gen: v5e
topology: v5e:2x2
jax: 0.10.0
libtpu: 0.0.40
codegen_flags: <defaults>
</compile_context>

<pallas_src>
import jax
import jax.numpy as jnp
from jax.experimental import pallas as pl
from jax.experimental.pallas import tpu as pltpu

_LANES = 128
_MAX_BLOCK_ROWS = 8192      # (8192, 128) f32 = 4 MiB per VMEM buffer
_MIN_PALLAS_ELEMS = 65536   # below this, plain fused XLA is strictly faster


def _round_up(a, m):
    return -(-a // m) * m


def _linear11_kernel(w_ref, b_ref, x_ref, o_ref):
    # w_ref, b_ref: (1, 1) scalars in SMEM; x_ref / o_ref: (block_rows, 128) VMEM tiles.
    w = w_ref[0, 0]
    b = b_ref[0, 0]
    o_ref[...] = x_ref[...] * w + b


def linear11(x, weight, bias, *, min_pallas_elems=_MIN_PALLAS_ELEMS):
    """Applies y = x @ weight.T + bias for a Linear(1, 1).

    x: (..., 1).  weight: (1, 1).  bias: (1,).  Returns float32 with x's shape.
    """
    orig_shape = x.shape
    assert orig_shape[-1] == 1, "Linear(1,1) expects last dim == 1"

    n = int(x.size)  # static
    w_scalar = weight.reshape(()).astype(jnp.float32)
    b_scalar = bias.reshape(()).astype(jnp.float32)

    # Small-input fast path: a single fused elementwise pass in XLA beats the
    # custom-call launch + a mostly-padded tile.
    if n == 0 or n < min_pallas_elems:
        return x.astype(jnp.float32) * w_scalar + b_scalar

    xf = x.reshape(-1).astype(jnp.float32)

    # Lane-dense layout.  Pad only to the next 8*128 boundary (and not at all
    # when n is already a multiple of 128*8); never round up to whole tiles.
    rows = -(-n // _LANES)                 # ceil(n / 128)
    rows8 = _round_up(rows, 8)             # sublane multiple
    padded_n = rows8 * _LANES
    needs_pad = padded_n != n
    if needs_pad:
        xf = jnp.pad(xf, (0, padded_n - n))
    x2d = xf.reshape(rows8, _LANES)

    # Tile selection: cap at 4 MiB/buffer, but also guarantee ~4 grid steps
    # for mid-size inputs so DMA in / compute / DMA out overlap.
    block_rows = max(8, min(_MAX_BLOCK_ROWS, _round_up(-(-rows8 // 4), 8)))
    num_blocks = pl.cdiv(rows8, block_rows)   # partial last block is masked

    w2d = weight.reshape(1, 1).astype(jnp.float32)
    b2d = bias.reshape(1, 1).astype(jnp.float32)

    grid_spec = pltpu.PrefetchScalarGridSpec(
        num_scalar_prefetch=0,
        grid=(num_blocks,),
        in_specs=[
            pl.BlockSpec(memory_space=pltpu.MemorySpace.SMEM),      # weight scalar
            pl.BlockSpec(memory_space=pltpu.MemorySpace.SMEM),      # bias scalar
            pl.BlockSpec((block_rows, _LANES), lambda i: (i, 0)),   # x row tile
        ],
        out_specs=pl.BlockSpec((block_rows, _LANES), lambda i: (i, 0)),
    )

    out2d = pl.pallas_call(
        _linear11_kernel,
        out_shape=jax.ShapeDtypeStruct((rows8, _LANES), jnp.float32),
        grid_spec=grid_spec,
        compiler_params=pltpu.CompilerParams(
            dimension_semantics=("parallel",),
            vmem_limit_bytes=32 * 1024 * 1024,
            # Let XLA fuse the (reshape / tail-pad) producer into the
            # pallas_call input instead of materializing it in HBM.
            allow_input_fusion=[False, False, True],
        ),
    )(w2d, b2d, x2d)

    if needs_pad:
        return out2d.reshape(-1)[:n].reshape(orig_shape)
    return out2d.reshape(orig_shape)


if __name__ == "__main__":
    # PyTorch Linear(1,1) default init: U(-1/sqrt(fan_in), 1/sqrt(fan_in)), fan_in=1.
    key = jax.random.PRNGKey(0)
    wkey, bkey, k1, k2, k3, k4 = jax.random.split(key, 6)
    weight = jax.random.uniform(wkey, (1, 1), jnp.float32, minval=-1.0, maxval=1.0)
    bias = jax.random.uniform(bkey, (1,), jnp.float32, minval=-1.0, maxval=1.0)

    def ref(x):
        return x @ weight.T + bias

    # 1) Canonical small module input (batch=2, seq=8, features=1): fast path.
    x_small = jax.random.normal(k1, (2, 8, 1), jnp.float32)
    y_small = jax.block_until_ready(linear11(x_small, weight, bias))
    assert y_small.shape == x_small.shape
    assert jnp.allclose(y_small, ref(x_small), atol=1e-6, rtol=1e-6)

    # 2) Lane-exact size -> no padding, 4 pipelined grid steps through Pallas.
    x_mid = jax.random.normal(k2, (2, 8192, 1), jnp.float32)      # n = 16384
    y_mid = jax.block_until_ready(linear11(x_mid, weight, bias, min_pallas_elems=0))
    assert jnp.allclose(y_mid, ref(x_mid), atol=1e-6, rtol=1e-6)

    # 3) Size whose row count is not a tile multiple -> masked partial last block.
    x_part = jax.random.normal(k3, (5, 1024, 1), jnp.float32)     # n = 5120, rows = 40
    y_part = jax.block_until_ready(linear11(x_part, weight, bias, min_pallas_elems=0))
    assert jnp.allclose(y_part, ref(x_part), atol=1e-6, rtol=1e-6)

    # 4) Ragged size -> tail pad to the next 8*128 boundary, sliced off on return.
    x_odd = jax.random.normal(k4, (3, 1001, 1), jnp.float32)      # n = 3003
    y_odd = jax.block_until_ready(linear11(x_odd, weight, bias, min_pallas_elems=0))
    assert y_odd.shape == x_odd.shape
    assert jnp.allclose(y_odd, ref(x_odd), atol=1e-6, rtol=1e-6)

    print("KERNEL_OK")
</pallas_src>

<mosaic_0001>
module attributes {stable_mosaic.version = 11 : i64} {
  func.func @_linear11_kernel(%arg0: i32, %arg1: memref<1x1xf32, #tpu.memory_space<smem>>, %arg2: memref<1x1xf32, #tpu.memory_space<smem>>, %arg3: memref<32x128xf32, #tpu.memory_space<vmem>>, %arg4: memref<32x128xf32, #tpu.memory_space<vmem>>) attributes {dimension_semantics = [#tpu.dimension_semantics<parallel>], iteration_bounds = array<i64: 4>, scalar_prefetch = 0 : i64, scratch_operands = 0 : i64, tpu.core_type = #tpu.core_type<tc>, window_params = [{transform_indices = @transform_0, window_bounds = array<i64: 1, 1>}, {transform_indices = @transform_1, window_bounds = array<i64: 1, 1>}, {transform_indices = @transform_2, window_bounds = array<i64: 32, 128>}, {transform_indices = @transform_3, window_bounds = array<i64: 32, 128>}]} {
    %c0 = arith.constant 0 : index
    %c0_0 = arith.constant 0 : index
    %0 = memref.load %arg1[%c0, %c0_0] : memref<1x1xf32, #tpu.memory_space<smem>>
    %c0_1 = arith.constant 0 : index
    %c0_2 = arith.constant 0 : index
    %1 = memref.load %arg2[%c0_1, %c0_2] : memref<1x1xf32, #tpu.memory_space<smem>>
    %c0_3 = arith.constant 0 : index
    %c0_4 = arith.constant 0 : index
    %2 = vector.load %arg3[%c0_3, %c0_4] : memref<32x128xf32, #tpu.memory_space<vmem>>, vector<32x128xf32>
    %3 = vector.broadcast %0 : f32 to vector<32x128xf32>
    %4 = arith.mulf %2, %3 : vector<32x128xf32>
    %5 = vector.broadcast %1 : f32 to vector<32x128xf32>
    %6 = arith.addf %4, %5 : vector<32x128xf32>
    %c0_5 = arith.constant 0 : index
    %c0_6 = arith.constant 0 : index
    %7 = vector.load %arg4[%c0_5, %c0_6] : memref<32x128xf32, #tpu.memory_space<vmem>>, vector<32x128xf32>
    tpu.vector_store %arg4[%c0_5, %c0_6], %6 {strides = array<i32>} : memref<32x128xf32, #tpu.memory_space<vmem>>, vector<32x128xf32>,
    return
  }
  func.func @transform_0(%arg0: i32) -> (i32, i32) {
    %c0_i32 = arith.constant 0 : i32
    %c0_i32_0 = arith.constant 0 : i32
    %c0_i32_1 = arith.constant 0 : i32
    return %c0_i32, %c0_i32_0 : i32, i32
  }
  func.func @transform_1(%arg0: i32) -> (i32, i32) {
    %c0_i32 = arith.constant 0 : i32
    %c0_i32_0 = arith.constant 0 : i32
    %c0_i32_1 = arith.constant 0 : i32
    return %c0_i32, %c0_i32_0 : i32, i32
  }
  func.func @transform_2(%arg0: i32) -> (i32, i32) {
    %c0_i32 = arith.constant 0 : i32
    %c0_i32_0 = arith.constant 0 : i32
    return %arg0, %c0_i32 : i32, i32
  }
  func.func @transform_3(%arg0: i32) -> (i32, i32) {
    %c0_i32 = arith.constant 0 : i32
    %c0_i32_0 = arith.constant 0 : i32
    return %arg0, %c0_i32 : i32, i32
  }
}

</mosaic_0001>

<llo_original>
// kernel: tpu_custom_call.1
$region0: #{tpu_custom_call.1}
  #allocation0 [shape = 'u32[]', space=smem, size = 0x4, offset = 0x4, fixed_abs, tag = 'smem constant byte address 0x4 - core index']
  #allocation1 [shape = 'u32[72,128]{1,0:T(1,128)}', space=vmem, size = 0x9000, scoped, tag = 'internal scratch']
  #allocation2 [shape = 'f32[1,1]{1,0:T(1,128)S(6)}', space=smem, size = 0x200, scoped, tag = 'scoped memory for tpu_custom_call.1']
  #allocation3 [shape = 'f32[1,1]{1,0:T(1,128)S(6)}', space=smem, size = 0x200, scoped, tag = 'scoped memory for tpu_custom_call.1']
  %s0 = inlined_call_operand.<no memory space> [shape: f32[1,1], index: 0, kind: input, shape index: {}]
  %s1 = inlined_call_operand.<no memory space> [shape: f32[1,1], index: 1, kind: input, shape index: {}]
  %s2 = inlined_call_operand.hbm [shape: f32[128,128], index: 2, kind: input, shape index: {}]
  %s3 = inlined_call_operand.hbm [shape: f32[128,128], index: 3, kind: output, shape index: {}]
  %s4 = sld [smem:[#allocation0]]
  $region49: #{tpu_custom_call.1} parent=0
    _
  %s6 = ssub.s32 1, %s4
  %s7 = scalar_select 0, %s6, %s4
  %8 = sst [smem:[#allocation2]] %s0
  %9 = sst [smem:[#allocation3]] %s1
  $region1: #{tpu_custom_call.1} parent=0
    #allocation4 [shape = 'u8[32768]{0}', space=vmem, size = 0x8000, scoped, tag = 'input window, operand 2']
    #allocation5 [shape = 's32[2]{0}', space=sflag, size = 0x8, scoped, tag = 'scoped memory for tpu_custom_call.1']
    #allocation6 [shape = 's32[2]{0}', space=sflag, size = 0x8, scoped, tag = 'scoped memory for tpu_custom_call.1']
    #allocation7 [shape = 'u8[32768]{0}', space=vmem, size = 0x8000, scoped, tag = 'output window, operand 0']
    %10 = vsyncpa [#allocation5], 0
    %s11 = scalar_lea.sflag [#allocation5], 1
    %12 = vsyncpa %s11, 0
    %13 = vsyncpa [#allocation6], 0
    %s14 = scalar_lea.sflag [#allocation6], 1
    %15 = vsyncpa %s14, 0
    loop: start=0, step=1, limit=6
    $region2: #{tpu_custom_call.1} parent=1 // loop_pre_header
      _
    $region3: #{tpu_custom_call.1} parent=1 // loop_header
      %s17 = sphi 0, %s21
      %p18 = scmp.ge.s32.totalorder %s17, 6
      %s25 = sphi 0, %s25
      %s27 = sphi 0, %s25
      %s28 = sphi 0, %s27
      %s42 = sphi 0, %s28
      %s46 = sphi 0, %s46
      %s48 = sphi 0, %s46
      %s49 = sphi 0, %s48
      %s63 = sphi 0, %s49
      %s69 = sphi 0, %s71
      %s72 = sphi 0, %s69
      %s73 = sphi 0, %s72
      %s89 = sphi 0, %s73
      %s95 = sphi 0, %s97
      %s98 = sphi 0, %s95
      %s99 = sphi 0, %s98
      %s115 = sphi 0, %s99
    $region4: #{tpu_custom_call.1} parent=1 // loop_header_branch
      %20 = sbr.rel (%p18) target = $region8
    $region5: #{tpu_custom_call.1} parent=1 // loop_body
      %s22 = ssub.s32 %s17, 1
      %s23 = ssub.s32 %s17, 2
      %s24 = sadd.s32 %s17, 1
      %s26 = sadd.s32 %s25, 1
      %p29 = scmp.eq.s32.totalorder %s17, 3
      %p30 = scmp.ne.s32.totalorder %s25, %s27
      %p31 = scmp.eq.s32.totalorder %s17, 0
      %p32 = por %p30, %p31
      %p33 = scmp.ne.s32.totalorder %s25, %s27
      %p34 = scmp.eq.s32.totalorder %s22, 3
      %p35 = por %p33, %p34
      %p36 = scmp.ne.s32.totalorder %s27, %s28
      %p37 = scmp.eq.s32.totalorder %s22, 0
      %p38 = por %p36, %p37
      %p39 = scmp.ne.s32.totalorder %s27, %s28
      %p40 = scmp.eq.s32.totalorder %s23, 3
      %p41 = por %p39, %p40
      %p43 = scmp.ne.s32.totalorder %s28, %s42
      %p44 = scmp.eq.s32.totalorder %s23, 0
      %p45 = por %p43, %p44
      %s47 = sadd.s32 %s46, 1
      %p50 = scmp.eq.s32.totalorder %s17, 3
      %p51 = scmp.ne.s32.totalorder %s46, %s48
      %p52 = scmp.eq.s32.totalorder %s17, 0
      %p53 = por %p51, %p52
      %p54 = scmp.ne.s32.totalorder %s46, %s48
      %p55 = scmp.eq.s32.totalorder %s22, 3
      %p56 = por %p54, %p55
      %p57 = scmp.ne.s32.totalorder %s48, %s49
      %p58 = scmp.eq.s32.totalorder %s22, 0
      %p59 = por %p57, %p58
      %p60 = scmp.ne.s32.totalorder %s48, %s49
      %p61 = scmp.eq.s32.totalorder %s23, 3
      %p62 = por %p60, %p61
      %p64 = scmp.ne.s32.totalorder %s49, %s63
      %p65 = scmp.eq.s32.totalorder %s23, 0
      %p66 = por %p64, %p65
      %s67 = ssub.s32 %s17, %s24
      %p68 = scmp.eq.s32.totalorder %s67, 0
      %s70 = sadd.s32 %s69, 1
      %s71 = scalar_select %p68, %s69, %s70
      %p74 = pneg %p68
      %p75 = scmp.eq.s32.totalorder %s17, 3
      %p76 = por %p74, %p75
      %p77 = scmp.ne.s32.totalorder %s69, %s72
      %p78 = scmp.eq.s32.totalorder %s17, 0
      %p79 = por %p77, %p78
      %p80 = scmp.ne.s32.totalorder %s69, %s72
      %p81 = scmp.eq.s32.totalorder %s22, 3
      %p82 = por %p80, %p81
      %p83 = scmp.ne.s32.totalorder %s72, %s73
      %p84 = scmp.eq.s32.totalorder %s22, 0
      %p85 = por %p83, %p84
      %p86 = scmp.ne.s32.totalorder %s72, %s73
      %p87 = scmp.eq.s32.totalorder %s23, 3
      %p88 = por %p86, %p87
      %p90 = scmp.ne.s32.totalorder %s73, %s89
      %p91 = scmp.eq.s32.totalorder %s23, 0
      %p92 = por %p90, %p91
      %s93 = ssub.s32 %s17, %s24
      %p94 = scmp.eq.s32.totalorder %s93, 0
      %s96 = sadd.s32 %s95, 1
      %s97 = scalar_select %p94, %s95, %s96
      %p100 = pneg %p94
      %p101 = scmp.eq.s32.totalorder %s17, 3
      %p102 = por %p100, %p101
      %p103 = scmp.ne.s32.totalorder %s95, %s98
      %p104 = scmp.eq.s32.totalorder %s17, 0
      %p105 = por %p103, %p104
      %p106 = scmp.ne.s32.totalorder %s95, %s98
      %p107 = scmp.eq.s32.totalorder %s22, 3
      %p108 = por %p106, %p107
      %p109 = scmp.ne.s32.totalorder %s98, %s99
      %p110 = scmp.eq.s32.totalorder %s22, 0
      %p111 = por %p109, %p110
      %p112 = scmp.ne.s32.totalorder %s98, %s99
      %p113 = scmp.eq.s32.totalorder %s23, 3
      %p114 = por %p112, %p113
      %p116 = scmp.ne.s32.totalorder %s99, %s115
      %p117 = scmp.eq.s32.totalorder %s23, 0
      %p118 = por %p116, %p117
      %p119 = scmp.le.s32.totalorder 1, %s17
      %p120 = scmp.lt.s32.totalorder %s17, 5
      %p121 = pnand %p119, %p120
      %p122 = pneg %p121
      // Predicated region
      $region9: #{tpu_custom_call.1} parent=5 // pred_check
        _
      $region10: #{tpu_custom_call.1} parent=5 // pred_check_branch
        %124 = sbr.rel (%p121) target = $region12
      $region11: #{tpu_custom_call.1} parent=5 // pred_region
        %s125 = ssub.s32 %s17, 1
        // Predicated region
        $region13: #{tpu_custom_call.1} parent=11 // pred_check
          %p126 = pneg %p38
        $region14: #{tpu_custom_call.1} parent=11 // pred_check_branch
          %128 = sbr.rel (%p126) target = $region16
        $region15: #{tpu_custom_call.1} parent=11 // pred_region
          _
        $region16: #{tpu_custom_call.1} parent=11 // pred_fallthru
          _
        // Predicated region
        $region17: #{tpu_custom_call.1} parent=11 // pred_check
          %p129 = pneg %p59
        $region18: #{tpu_custom_call.1} parent=11 // pred_check_branch
          %131 = sbr.rel (%p129) target = $region20
        $region19: #{tpu_custom_call.1} parent=11 // pred_region
          _
        $region20: #{tpu_custom_call.1} parent=11 // pred_fallthru
          _
      $region12: #{tpu_custom_call.1} parent=5 // pred_fallthru
        _
      %p132 = scmp.lt.s32.totalorder %s17, 4
      // Predicated region
      $region21: #{tpu_custom_call.1} parent=5 // pred_check
        %p133 = pneg %p132
      $region22: #{tpu_custom_call.1} parent=5 // pred_check_branch
        %135 = sbr.rel (%p133) target = $region24
      $region23: #{tpu_custom_call.1} parent=5 // pred_region
        // Predicated region
        $region25: #{tpu_custom_call.1} parent=23 // pred_check
          %p136 = pneg %p79
        $region26: #{tpu_custom_call.1} parent=23 // pred_check_branch
          %138 = sbr.rel (%p136) target = $region28
        $region27: #{tpu_custom_call.1} parent=23 // pred_region
          %s139 = sand.u32 %s69, 1
          %s140 = scalar_lea.sflag [#allocation5], %s139
          %s141 = sand.u32 %s69, 1
          %s142 = smul.addr %s141, 32
          %s143 = scalar_lea.vmem [#allocation4], %s142
          %s144 = smul.u32 4, %s17
          %146 = vsyncadd %s140, 0
          %s147 = smul.addr %s144, 8
          %s148 = scalar_lea.hbm %s2, %s147
          %s149 = sshll.u32 %s148, 4
          %s150 = int_to_ptr.hbm [resolvable:$true] %s149
          %s151 = sshll.u32 %s143, 4
          %s152 = int_to_ptr.vmem [resolvable:$true] %s151
          %157 = dma.hbm_to_vmem [thread:$0]  %s150, 512, %s152, %s140, 128, 128, 8
        $region28: #{tpu_custom_call.1} parent=23 // pred_fallthru
          _
      $region24: #{tpu_custom_call.1} parent=5 // pred_fallthru
        _
      %p158 = scmp.le.s32.totalorder 1, %s17
      %p159 = scmp.lt.s32.totalorder %s17, 5
      %p160 = pnand %p158, %p159
      %p161 = pneg %p160
      // Predicated region
      $region29: #{tpu_custom_call.1} parent=5 // pred_check
        _
      $region30: #{tpu_custom_call.1} parent=5 // pred_check_branch
        %163 = sbr.rel (%p160) target = $region32
      $region31: #{tpu_custom_call.1} parent=5 // pred_region
        %s164 = ssub.s32 %s17, 1
        %s165 = sand.u32 %s72, 1
        %s166 = scalar_lea.sflag [#allocation5], %s165
        %s167 = sand.u32 %s72, 1
        %s168 = smul.addr %s167, 32
        %s169 = scalar_lea.vmem [#allocation4], %s168
        // Predicated region
        $region33: #{tpu_custom_call.1} parent=31 // pred_check
          %p170 = pneg %p85
        $region34: #{tpu_custom_call.1} parent=31 // pred_check_branch
          %172 = sbr.rel (%p170) target = $region36
        $region35: #{tpu_custom_call.1} parent=31 // pred_region
          %174 = dma.done %s166, 512
        $region36: #{tpu_custom_call.1} parent=31 // pred_fallthru
          _
        %p175 = pneg %p38
        %p176 = pneg %p35
        %p177 = pneg %p59
        %p178 = pneg %p56
        %s179 = sand.u32 %s72, 1
        %s180 = scalar_lea.sflag [#allocation5], %s179
        %s181 = sand.u32 %s72, 1
        %s182 = smul.addr %s181, 32
        %s183 = scalar_lea.vmem [#allocation4], %s182
        %p184 = pneg %p85
        %p185 = pneg %p82
        %p186 = pneg %p111
        %p187 = pneg %p108
        %s188 = sand.u32 %s98, 1
        %s189 = scalar_lea.sflag [#allocation6], %s188
        %s190 = sand.u32 %s98, 1
        %s191 = smul.addr %s190, 32
        %s192 = scalar_lea.vmem [#allocation7], %s191
        %s193 = smul.u32 4, %s22
        %s194 = smul.u32 4, %s22
        %s195 = sld [smem:[#allocation2]]
        %s196 = sld [smem:[#allocation3]]
        %v197 = vld [vmem:[%s169] sm:$0xff]
        %v198 = vld [vmem:[%s169 + $0x8] sm:$0xff]
        %v199 = vld [vmem:[%s169 + $0x10] sm:$0xff]
        %v200 = vld [vmem:[%s169 + $0x18] sm:$0xff]
        %v201 = vstv %s195
        %v202 = vmul.f32 %v197, %v201
        %v203 = vmul.f32 %v198, %v201
        %v204 = vmul.f32 %v199, %v201
        %v205 = vmul.f32 %v200, %v201
        %v206 = vstv %s196
        %v207 = vadd.f32 %v202, %v206
        %v208 = vadd.f32 %v203, %v206
        %v209 = vadd.f32 %v204, %v206
        %v210 = vadd.f32 %v205, %v206
        %211 = vst [vmem:[%s192] sm:$0xff] %v207
        %212 = vst [vmem:[%s192 + $0x8] sm:$0xff] %v208
        %213 = vst [vmem:[%s192 + $0x10] sm:$0xff] %v209
        %214 = vst [vmem:[%s192 + $0x18] sm:$0xff] %v210
        %s215 = sand.u32 %s98, 1
        %s216 = scalar_lea.sflag [#allocation6], %s215
        %s217 = sand.u32 %s98, 1
        %s218 = smul.addr %s217, 32
        %s219 = scalar_lea.vmem [#allocation7], %s218
        // Predicated region
        $region37: #{tpu_custom_call.1} parent=31 // pred_check
          %p220 = pneg %p108
        $region38: #{tpu_custom_call.1} parent=31 // pred_check_branch
          %222 = sbr.rel (%p220) target = $region40
        $region39: #{tpu_custom_call.1} parent=31 // pred_region
          %s223 = smul.u32 4, %s22
          %225 = vsyncadd %s216, 0
          %s226 = smul.addr %s223, 8
          %s227 = scalar_lea.hbm %s3, %s226
          %s228 = sshll.u32 %s219, 4
          %s229 = int_to_ptr.vmem [resolvable:$true] %s228
          %s230 = sshll.u32 %s227, 4
          %s231 = int_to_ptr.hbm [resolvable:$true] %s230
          %236 = dma.vmem_to_hbm [thread:$0]  %s229, 512, %s231, %s216, 128, 128, 8
        $region40: #{tpu_custom_call.1} parent=31 // pred_fallthru
          _
      $region32: #{tpu_custom_call.1} parent=5 // pred_fallthru
        _
      %p237 = scmp.le.s32.totalorder 2, %s17
      // Predicated region
      $region41: #{tpu_custom_call.1} parent=5 // pred_check
        %p238 = pneg %p237
      $region42: #{tpu_custom_call.1} parent=5 // pred_check_branch
        %240 = sbr.rel (%p238) target = $region44
      $region43: #{tpu_custom_call.1} parent=5 // pred_region
        %s241 = ssub.s32 %s17, 2
        // Predicated region
        $region45: #{tpu_custom_call.1} parent=43 // pred_check
          %p242 = pneg %p114
        $region46: #{tpu_custom_call.1} parent=43 // pred_check_branch
          %244 = sbr.rel (%p242) target = $region48
        $region47: #{tpu_custom_call.1} parent=43 // pred_region
          %s245 = sand.u32 %s99, 1
          %s246 = scalar_lea.sflag [#allocation6], %s245
          %s247 = sand.u32 %s99, 1
          %s248 = smul.addr %s247, 32
          %s249 = scalar_lea.vmem [#allocation7], %s248
          %251 = dma.done %s246, 512
        $region48: #{tpu_custom_call.1} parent=43 // pred_fallthru
          _
      $region44: #{tpu_custom_call.1} parent=5 // pred_fallthru
        _
    $region6: #{tpu_custom_call.1} parent=1 // loop_footer
      %s21 = sadd.s32 1, %s17
    $region7: #{tpu_custom_call.1} parent=1 // loop_footer_branch
      %16 = sbr.rel target = $region3
    $region8: #{tpu_custom_call.1} parent=1 // loop_exit
      _
    %252 = vsyncpa [#allocation5], 1
    %s253 = scalar_lea.sflag [#allocation5], 1
    %254 = vsyncpa %s253, 1
    %255 = vsyncpa [#allocation6], 1
    %s256 = scalar_lea.sflag [#allocation6], 1
    %257 = vsyncpa %s256, 1

</llo_original>
